<compile_context>
chip_gen: v7x
topology: tpu7x:2x2x1
jax: 0.10.0
libtpu: 0.0.40
codegen_flags: <defaults>
</compile_context>

<pallas_src>
import jax
import jax.numpy as jnp
from jax.experimental import pallas as pl
from jax.experimental.pallas import tpu as pltpu


def _mean_pool_kernel(x_ref, mask_ref, out_ref):
    # x_ref:    (TB, S, D)  hidden states for TB sequences
    # mask_ref: (TB, S)     attention mask, float32, lane-dense
    # out_ref:  (TB, D)     float32 masked-mean embeddings
    x = x_ref[...].astype(jnp.float32)                    # (TB, S, D)
    m = mask_ref[...]                                     # (TB, S)

    # Masked sum over the sequence axis (VPU multiply + sublane reduce).
    summed = jnp.sum(x * m[:, :, None], axis=1)           # (TB, D)

    # Valid-token count per sequence (dense lane reduce), clamped like
    # torch.clamp(sum_mask, min=1e-9).
    cnt = jnp.sum(m, axis=-1, keepdims=True)              # (TB, 1)
    cnt = jnp.maximum(cnt, 1e-9)

    out_ref[...] = (summed / cnt).astype(out_ref.dtype)   # (TB, D)


def mean_pooling(last_hidden_state, attention_mask, *, block_b=None):
    """last_hidden_state: [B, S, D]; attention_mask: [B, S] -> [B, D] float32."""
    B, S, D = last_hidden_state.shape
    mask = attention_mask.astype(jnp.float32).reshape(B, S)

    # Batch several sequences per grid step. block_b is either B itself (block
    # equals the full batch dim) or a multiple of 8, so the (8, 128) block
    # constraint on the 2-D mask/output specs is always satisfied.
    if block_b is None:
        block_b = B if B <= 8 else 8
    # TODO(synk): for very large S*D on v7x (64 MiB VMEM) shrink block_b /
    # set vmem_limit_bytes so 2x double-buffered x tiles still fit.

    num_blocks = pl.cdiv(B, block_b)
    B_pad = num_blocks * block_b
    if B_pad != B:
        pad = B_pad - B
        # Padded rows have an all-zero mask: count clamps to 1e-9 and the
        # padded outputs (all zeros) are sliced off below.
        last_hidden_state = jnp.pad(last_hidden_state,
                                    ((0, pad), (0, 0), (0, 0)))
        mask = jnp.pad(mask, ((0, pad), (0, 0)))

    out = pl.pallas_call(
        _mean_pool_kernel,
        out_shape=jax.ShapeDtypeStruct((B_pad, D), jnp.float32),
        grid=(num_blocks,),
        in_specs=[
            pl.BlockSpec((block_b, S, D), lambda b: (b, 0, 0)),   # x
            pl.BlockSpec((block_b, S), lambda b: (b, 0)),         # mask
        ],
        out_specs=pl.BlockSpec((block_b, D), lambda b: (b, 0)),
        compiler_params=pltpu.CompilerParams(
            dimension_semantics=("parallel",)),
    )(last_hidden_state, mask)

    return out[:B]


def _reference(last_hidden_state, attention_mask):
    """Plain-JAX reference mirroring the PyTorch MeanPooling.forward exactly."""
    m = attention_mask.astype(jnp.float32)[..., None]          # (B, S, 1)
    x = last_hidden_state.astype(jnp.float32)
    sum_embeddings = jnp.sum(x * m, axis=1)                    # (B, D)
    sum_mask = jnp.maximum(jnp.sum(m, axis=1), 1e-9)           # (B, 1)
    return sum_embeddings / sum_mask


if __name__ == "__main__":
    B, S, D = 2, 8, 32
    key = jax.random.PRNGKey(0)
    last_hidden_state = jax.random.normal(key, (B, S, D), jnp.float32)
    attention_mask = jnp.array(
        [[1, 1, 1, 1, 1, 1, 0, 0],
         [1, 1, 1, 0, 0, 0, 0, 0]], dtype=jnp.int32)

    out = mean_pooling(last_hidden_state, attention_mask)
    out = jax.block_until_ready(out)

    ref = _reference(last_hidden_state, attention_mask)
    assert out.shape == (B, D)
    assert jnp.allclose(out, ref, atol=1e-5, rtol=1e-5), "mismatch vs reference"
    print("KERNEL_OK")
</pallas_src>

<mosaic_0001>
module attributes {stable_mosaic.version = 11 : i64} {
  func.func @_mean_pool_kernel(%arg0: i32, %arg1: memref<2x8x32xf32, #tpu.memory_space<vmem>>, %arg2: memref<2x8xf32, #tpu.memory_space<vmem>>, %arg3: memref<2x32xf32, #tpu.memory_space<vmem>>) attributes {dimension_semantics = [#tpu.dimension_semantics<parallel>], iteration_bounds = array<i64: 1>, scalar_prefetch = 0 : i64, scratch_operands = 0 : i64, tpu.core_type = #tpu.core_type<tc>, window_params = [{transform_indices = @transform_0, window_bounds = array<i64: 2, 8, 32>}, {transform_indices = @transform_1, window_bounds = array<i64: 2, 8>}, {transform_indices = @transform_2, window_bounds = array<i64: 2, 32>}]} {
    %c0 = arith.constant 0 : index
    %c0_0 = arith.constant 0 : index
    %c0_1 = arith.constant 0 : index
    %0 = vector.load %arg1[%c0, %c0_0, %c0_1] : memref<2x8x32xf32, #tpu.memory_space<vmem>>, vector<2x8x32xf32>
    %c0_2 = arith.constant 0 : index
    %c0_3 = arith.constant 0 : index
    %1 = vector.load %arg2[%c0_2, %c0_3] : memref<2x8xf32, #tpu.memory_space<vmem>>, vector<2x8xf32>
    %2 = vector.shape_cast %1 : vector<2x8xf32> to vector<2x8x1xf32>
    %3 = vector.broadcast %2 : vector<2x8x1xf32> to vector<2x8x32xf32>
    %4 = arith.mulf %0, %3 : vector<2x8x32xf32>
    %cst = arith.constant dense<0.000000e+00> : vector<2x32xf32>
    %5 = vector.multi_reduction <add>, %4, %cst [1] : vector<2x8x32xf32> to vector<2x32xf32>
    %cst_4 = arith.constant dense<0.000000e+00> : vector<2xf32>
    %6 = vector.multi_reduction <add>, %1, %cst_4 [1] : vector<2x8xf32> to vector<2xf32>
    %7 = vector.shape_cast %6 : vector<2xf32> to vector<2x1xf32>
    %cst_5 = arith.constant 9.99999971E-10 : f32
    %8 = vector.broadcast %cst_5 : f32 to vector<2x1xf32>
    %9 = arith.maximumf %7, %8 : vector<2x1xf32>
    %10 = vector.broadcast %9 : vector<2x1xf32> to vector<2x32xf32>
    %11 = arith.divf %5, %10 : vector<2x32xf32>
    %c0_6 = arith.constant 0 : index
    %c0_7 = arith.constant 0 : index
    %12 = vector.load %arg3[%c0_6, %c0_7] : memref<2x32xf32, #tpu.memory_space<vmem>>, vector<2x32xf32>
    tpu.vector_store %arg3[%c0_6, %c0_7], %11 {strides = array<i32>} : memref<2x32xf32, #tpu.memory_space<vmem>>, vector<2x32xf32>,
    return
  }
  func.func @transform_0(%arg0: i32) -> (i32, i32, i32) {
    %c0_i32 = arith.constant 0 : i32
    %c0_i32_0 = arith.constant 0 : i32
    %c0_i32_1 = arith.constant 0 : i32
    return %arg0, %c0_i32, %c0_i32_0 : i32, i32, i32
  }
  func.func @transform_1(%arg0: i32) -> (i32, i32) {
    %c0_i32 = arith.constant 0 : i32
    %c0_i32_0 = arith.constant 0 : i32
    return %arg0, %c0_i32 : i32, i32
  }
  func.func @transform_2(%arg0: i32) -> (i32, i32) {
    %c0_i32 = arith.constant 0 : i32
    %c0_i32_0 = arith.constant 0 : i32
    return %arg0, %c0_i32 : i32, i32
  }
}

</mosaic_0001>

<llo_original>
// kernel: tpu_custom_call.1
$region0: #{tpu_custom_call.1}
  #allocation0 [shape = 'u32[]', space=smem, size = 0x4, offset = 0x4, fixed_abs, tag = 'smem constant byte address 0x4 - core index']
  #allocation1 [shape = 'u32[144,128]{1,0:T(1,128)}', space=vmem, size = 0x12000, scoped, tag = 'internal scratch']
  %s0 = inlined_call_operand.hbm [shape: f32[2,8,32], index: 0, kind: input, shape index: {}]
  %s1 = inlined_call_operand.vmem [shape: f32[2,8], index: 1, kind: input, shape index: {}]
  %s2 = inlined_call_operand.hbm [shape: f32[2,32], index: 2, kind: output, shape index: {}]
  %s3 = sld [smem:[#allocation0]]
  $region22: #{tpu_custom_call.1} parent=0
    _
  %s5 = ssub.s32 1, %s3
  %s6 = scalar_select 0, %s5, %s3
  $region1: #{tpu_custom_call.1} parent=0
    #allocation2 [shape = 'u8[8192]{0}', space=vmem, size = 0x2000, scoped, tag = 'input window, operand 0, single buffered']
    #allocation3 [shape = 's32[1]{0}', space=sflag, size = 0x4, scoped, tag = 'scoped memory for tpu_custom_call.1']
    #allocation4 [shape = 's32[1]{0}', space=sflag, size = 0x4, scoped, tag = 'scoped memory for tpu_custom_call.1']
    #allocation5 [shape = 'u8[1024]{0}', space=vmem, size = 0x400, scoped, tag = 'output window, operand 0, single buffered']
    %7 = vsyncpa [#allocation3], 0
    %8 = vsyncpa [#allocation4], 0
    // Predicated region
    $region2: #{tpu_custom_call.1} parent=1 // pred_check
      _
    $region3: #{tpu_custom_call.1} parent=1 // pred_check_branch
      %10 = sbr.rel (0) target = $region5
    $region4: #{tpu_custom_call.1} parent=1 // pred_region
      %s12 = ssub.s32 256, 256
      %13 = vsyncadd [#allocation3], %s12
      %s14 = sshll.u32 [#allocation2], 4
      %s15 = int_to_ptr.vmem [resolvable:$true] %s14
      %20 = dma.hbm_to_vmem [thread:$0]  %s0, 256, %s15, [#allocation3], 128, 128, 8
    $region5: #{tpu_custom_call.1} parent=1 // pred_fallthru
      _
    // Predicated region
    $region6: #{tpu_custom_call.1} parent=1 // pred_check
      _
    $region7: #{tpu_custom_call.1} parent=1 // pred_check_branch
      %22 = sbr.rel (0) target = $region9
    $region8: #{tpu_custom_call.1} parent=1 // pred_region
      _
    $region9: #{tpu_custom_call.1} parent=1 // pred_fallthru
      _
    // Predicated region
    $region10: #{tpu_custom_call.1} parent=1 // pred_check
      _
    $region11: #{tpu_custom_call.1} parent=1 // pred_check_branch
      %24 = sbr.rel (0) target = $region13
    $region12: #{tpu_custom_call.1} parent=1 // pred_region
      %25 = dma.done [#allocation3], 256
    $region13: #{tpu_custom_call.1} parent=1 // pred_fallthru
      _
    %v26 = vld [vmem:[#allocation2] sm:$0xff]
    %v27 = vld [vmem:[#allocation2 + $0x8] sm:$0xff]
    %v28 = vld [vmem:[%s1] sm:$0x3]
    %v29 = vlaneseq
    %v30 = vshrl.u32 %v29, 7
    %v31 = vsub.s32 0, %v30
    %v32 = vrot.slane %v28, %v31
    %34 = vbcast.lane.b32.xlu0 %v32, 256
    %v35 = vpop.permute.xlu0 %34
    %v36 = vlaneseq
    %v37 = vshrl.u32 %v36, 7
    %v38 = vsub.s32 1, %v37
    %v39 = vrot.slane %v28, %v38
    %41 = vbcast.lane.b32.xlu0 %v39, 256
    %v42 = vpop.permute.xlu0 %41
    %v43 = vmul.f32 %v26, %v35
    %v44 = vmul.f32 %v27, %v42
    %vm45 = vcmask 261120
    %v46 = vsel %vm45, %v43, 0.0
    %v47 = vrot.slane %v46, 4
    %v48 = vadd.f32 %v46, %v47
    %v49 = vrot.slane %v48, 2
    %v50 = vadd.f32 %v48, %v49
    %v51 = vrot.slane %v50, 1
    %v52 = vadd.f32 %v50, %v51
    %v53 = vsel %vm45, %v44, 0.0
    %v54 = vrot.slane %v53, 4
    %v55 = vadd.f32 %v53, %v54
    %v56 = vrot.slane %v55, 2
    %v57 = vadd.f32 %v55, %v56
    %v58 = vrot.slane %v57, 1
    %v59 = vadd.f32 %v57, %v58
    %vm60 = vcmask 58368
    %v61 = vsel %vm60, %v28, 0.0
    %62 = vadd.xlane.f32.xlu0 %v61
    %v63 = vpop.xlane.xlu0 %62
    %v64 = vmax.f32 %v63, 1e-09
    %v66 = vrot.slane %v64, 1
    %v69 = vrcp.pop %v64
    %v70 = vmul.f32 %v52, %v69
    %v71 = vrcp.pop %v66
    %v72 = vmul.f32 %v59, %v71
    %v75 = vrot.slane %v72, 7
    %vm76 = vcmask 1041409
    %v77 = vsel %vm76, %v75, %v70
    %vm79 = vcmask 254976
    %80 = vst.msk [vmem:[#allocation5] sm:$0x3] %vm79, %v77
    // Predicated region
    $region14: #{tpu_custom_call.1} parent=1 // pred_check
      _
    $region15: #{tpu_custom_call.1} parent=1 // pred_check_branch
      %82 = sbr.rel (0) target = $region17
    $region16: #{tpu_custom_call.1} parent=1 // pred_region
      %s84 = ssub.s32 32, 32
      %85 = vsyncadd [#allocation4], %s84
      %s87 = sshll.u32 [#allocation5], 4
      %s88 = int_to_ptr.vmem [resolvable:$true] %s87
      %90 = dma.vmem_to_hbm [thread:$0]  %s88, 32, %s2, [#allocation4]
    $region17: #{tpu_custom_call.1} parent=1 // pred_fallthru
      _
    // Predicated region
    $region18: #{tpu_custom_call.1} parent=1 // pred_check
      _
    $region19: #{tpu_custom_call.1} parent=1 // pred_check_branch
      %92 = sbr.rel (0) target = $region21
    $region20: #{tpu_custom_call.1} parent=1 // pred_region
      %93 = dma.done [#allocation4], 32
    $region21: #{tpu_custom_call.1} parent=1 // pred_fallthru
      _
    %94 = vsyncpa [#allocation3], 1
    %95 = vsyncpa [#allocation4], 1

</llo_original>
